<compile_context>
chip_gen: v7x
topology: tpu7x:2x2x1
jax: 0.10.0
libtpu: 0.0.40
codegen_flags: <defaults>
</compile_context>

<pallas_src>
import jax
import jax.numpy as jnp
from jax import lax
from jax.experimental import pallas as pl
from jax.experimental.pallas import tpu as pltpu


def lrn_kernel(x_ref, o_ref, xsq_ref):
    # x_ref / o_ref : (C, t_hw) input / output blocks (batch dim squeezed).
    # xsq_ref       : (Cp, t_hw) f32 VMEM scratch.  Rows [2, C+2) hold x^2,
    #                 rows 0..1 and C+2..C+3 are zeroed (the only halo rows
    #                 the window below ever reads).
    c = o_ref.shape[0]
    t_hw = o_ref.shape[1]

    x = x_ref[...].astype(jnp.float32)

    zeros2 = jnp.zeros((2, t_hw), jnp.float32)
    xsq_ref[0:2, :] = zeros2                  # top halo
    xsq_ref[c + 2:c + 4, :] = zeros2          # bottom halo (re-zeroed each step:
                                              # cheap VMEM-only work, safe on
                                              # megacore-sharded grids)
    xsq_ref[2:c + 2, :] = x * x

    # 5-wide cross-channel window sum: five sublane-shifted loads of the
    # scratch; boundary zeros come from the halo rows, so no masking needed.
    sumsq = (xsq_ref[0:c, :] + xsq_ref[1:c + 1, :] + xsq_ref[2:c + 2, :]
             + xsq_ref[3:c + 3, :] + xsq_ref[4:c + 4, :])

    d = 2.0 + 1e-4 * sumsq
    r = lax.rsqrt(d)                          # d**-0.5   (EUP)
    inv = r * jnp.sqrt(r)                     # d**-0.75 = d**-0.5 * d**-0.25
    o_ref[...] = (x * inv).astype(o_ref.dtype)


def _round_up(a, b):
    return ((a + b - 1) // b) * b


def lrn(x, *, vmem_budget_bytes=28 * 1024 * 1024,
        target_step_bytes=4 * 1024 * 1024):
    """x: (N, C, H, W) -> (N, C, H, W); same semantics as the torch LRN module."""
    N, C, H, W = x.shape
    HW = H * W
    itemsize = jnp.dtype(x.dtype).itemsize
    Cp = _round_up(C + 4, 8)          # scratch rows: 2-row halo each side, 8-aligned

    # ---- lane-tile (t_hw) selection -------------------------------------
    # (a) target ~4 MiB of HBM traffic per grid step (read + write of the tile)
    t_traffic = max(128, target_step_bytes // (2 * C * itemsize))
    # (b) VMEM working set per step: double-buffered in+out blocks, the
    #     (Cp, t_hw) f32 scratch, and ~4 f32 temporaries of shape (C, t_hw).
    per_lane_bytes = 4 * C * itemsize + 4 * Cp + 16 * C
    t_vmem = max(128, vmem_budget_bytes // per_lane_bytes)

    t_hw = (min(t_traffic, t_vmem) // 128) * 128          # multiple of 128
    t_hw = max(128, min(t_hw, _round_up(HW, 128)))         # never past the array
    # Keep >= 2 grid steps so a v7x megacore can shard the 'parallel' axes
    # when the batch dimension provides no parallelism.
    if N == 1 and HW > 128 and pl.cdiv(HW, t_hw) < 2:
        t_hw = max(128, _round_up(pl.cdiv(HW, 2), 128))

    xf = x.reshape(N, C, HW)          # free: merges trailing dims, no HBM pass

    out = pl.pallas_call(
        lrn_kernel,
        out_shape=jax.ShapeDtypeStruct((N, C, HW), x.dtype),
        grid=(N, pl.cdiv(HW, t_hw)),
        in_specs=[pl.BlockSpec((None, C, t_hw), lambda n, s: (n, 0, s))],
        out_specs=pl.BlockSpec((None, C, t_hw), lambda n, s: (n, 0, s)),
        scratch_shapes=[pltpu.VMEM((Cp, t_hw), jnp.float32)],
        compiler_params=pltpu.CompilerParams(
            dimension_semantics=("parallel", "parallel"),
            vmem_limit_bytes=48 * 1024 * 1024),
    )(xf)
    return out.reshape(N, C, H, W)


def lrn_ref(x):
    """Pure-JAX reference identical to the PyTorch forward."""
    C = x.shape[1]
    xsq = x * x
    xp = jnp.pad(xsq, ((0, 0), (2, 2), (0, 0), (0, 0)))
    sumsq = sum(xp[:, i:i + C] for i in range(5))
    return x / (2.0 + 1e-4 * sumsq) ** 0.75


if __name__ == "__main__":
    key = jax.random.PRNGKey(0)
    k1, k2, k3 = jax.random.split(key, 3)

    # Primary shape implied by the module spec.
    x = jax.random.normal(k1, (2, 4, 16, 16), dtype=jnp.float32)
    y = lrn(x)
    jax.block_until_ready(y)
    assert y.shape == x.shape and y.dtype == x.dtype
    assert jnp.allclose(y, lrn_ref(x), atol=1e-5, rtol=1e-5), "mismatch vs reference"

    # Ragged lane path: spatial not a multiple of 128, odd channel count.
    x2 = jax.random.normal(k2, (2, 6, 15, 15), dtype=jnp.float32)
    y2 = lrn(x2)
    jax.block_until_ready(y2)
    assert jnp.allclose(y2, lrn_ref(x2), atol=1e-5, rtol=1e-5), \
        "mismatch vs reference (ragged path)"

    # N == 1 path: spatial axis forced into >= 2 tiles for megacore sharding.
    x3 = jax.random.normal(k3, (1, 8, 32, 32), dtype=jnp.float32)
    y3 = lrn(x3)
    jax.block_until_ready(y3)
    assert jnp.allclose(y3, lrn_ref(x3), atol=1e-5, rtol=1e-5), \
        "mismatch vs reference (N==1 split path)"

    print("KERNEL_OK")
</pallas_src>

<mosaic_0001>
module attributes {stable_mosaic.version = 11 : i64} {
  func.func @lrn_kernel(%arg0: i32, %arg1: i32, %arg2: memref<1x4x256xf32, #tpu.memory_space<vmem>>, %arg3: memref<1x4x256xf32, #tpu.memory_space<vmem>>, %arg4: memref<8x256xf32, #tpu.memory_space<vmem>>) attributes {dimension_semantics = [#tpu.dimension_semantics<parallel>, #tpu.dimension_semantics<parallel>], iteration_bounds = array<i64: 2, 1>, scalar_prefetch = 0 : i64, scratch_operands = 1 : i64, tpu.core_type = #tpu.core_type<tc>, window_params = [{transform_indices = @transform_0, window_bounds = array<i64: 1, 4, 256>}, {transform_indices = @transform_1, window_bounds = array<i64: 1, 4, 256>}]} {
    %c0 = arith.constant 0 : index
    %c0_0 = arith.constant 0 : index
    %c0_1 = arith.constant 0 : index
    %0 = vector.load %arg2[%c0, %c0_0, %c0_1] : memref<1x4x256xf32, #tpu.memory_space<vmem>>, vector<1x4x256xf32>
    %1 = vector.shape_cast %0 : vector<1x4x256xf32> to vector<4x256xf32>
    %cst = arith.constant 0.000000e+00 : f32
    %2 = vector.broadcast %cst : f32 to vector<2x256xf32>
    %c0_2 = arith.constant 0 : index
    %c0_3 = arith.constant 0 : index
    %3 = vector.load %arg4[%c0_2, %c0_3] : memref<8x256xf32, #tpu.memory_space<vmem>>, vector<2x256xf32>
    tpu.vector_store %arg4[%c0_2, %c0_3], %2 {strides = array<i32>} : memref<8x256xf32, #tpu.memory_space<vmem>>, vector<2x256xf32>,
    %c6 = arith.constant 6 : index
    %c0_4 = arith.constant 0 : index
    %4 = vector.load %arg4[%c6, %c0_4] : memref<8x256xf32, #tpu.memory_space<vmem>>, vector<2x256xf32>
    tpu.vector_store %arg4[%c6, %c0_4], %2 {strides = array<i32>} : memref<8x256xf32, #tpu.memory_space<vmem>>, vector<2x256xf32>,
    %5 = arith.mulf %1, %1 : vector<4x256xf32>
    %c2 = arith.constant 2 : index
    %c0_5 = arith.constant 0 : index
    %6 = vector.load %arg4[%c2, %c0_5] : memref<8x256xf32, #tpu.memory_space<vmem>>, vector<4x256xf32>
    tpu.vector_store %arg4[%c2, %c0_5], %5 {strides = array<i32>} : memref<8x256xf32, #tpu.memory_space<vmem>>, vector<4x256xf32>,
    %c0_6 = arith.constant 0 : index
    %c0_7 = arith.constant 0 : index
    %7 = vector.load %arg4[%c0_6, %c0_7] : memref<8x256xf32, #tpu.memory_space<vmem>>, vector<4x256xf32>
    %c1 = arith.constant 1 : index
    %c0_8 = arith.constant 0 : index
    %8 = vector.load %arg4[%c1, %c0_8] : memref<8x256xf32, #tpu.memory_space<vmem>>, vector<4x256xf32>
    %9 = arith.addf %7, %8 : vector<4x256xf32>
    %c2_9 = arith.constant 2 : index
    %c0_10 = arith.constant 0 : index
    %10 = vector.load %arg4[%c2_9, %c0_10] : memref<8x256xf32, #tpu.memory_space<vmem>>, vector<4x256xf32>
    %11 = arith.addf %9, %10 : vector<4x256xf32>
    %c3 = arith.constant 3 : index
    %c0_11 = arith.constant 0 : index
    %12 = vector.load %arg4[%c3, %c0_11] : memref<8x256xf32, #tpu.memory_space<vmem>>, vector<4x256xf32>
    %13 = arith.addf %11, %12 : vector<4x256xf32>
    %c4 = arith.constant 4 : index
    %c0_12 = arith.constant 0 : index
    %14 = vector.load %arg4[%c4, %c0_12] : memref<8x256xf32, #tpu.memory_space<vmem>>, vector<4x256xf32>
    %15 = arith.addf %13, %14 : vector<4x256xf32>
    %cst_13 = arith.constant 9.99999974E-5 : f32
    %16 = vector.broadcast %cst_13 : f32 to vector<4x256xf32>
    %17 = arith.mulf %16, %15 : vector<4x256xf32>
    %cst_14 = arith.constant 2.000000e+00 : f32
    %18 = vector.broadcast %cst_14 : f32 to vector<4x256xf32>
    %19 = arith.addf %18, %17 : vector<4x256xf32>
    %20 = math.rsqrt %19 : vector<4x256xf32>
    %21 = math.sqrt %20 : vector<4x256xf32>
    %22 = arith.mulf %20, %21 : vector<4x256xf32>
    %23 = arith.mulf %1, %22 : vector<4x256xf32>
    %c0_15 = arith.constant 0 : index
    %c0_16 = arith.constant 0 : index
    %c0_17 = arith.constant 0 : index
    %24 = vector.load %arg3[%c0_15, %c0_16, %c0_17] : memref<1x4x256xf32, #tpu.memory_space<vmem>>, vector<1x4x256xf32>
    %25 = vector.shape_cast %24 : vector<1x4x256xf32> to vector<4x256xf32>
    %26 = vector.shape_cast %23 : vector<4x256xf32> to vector<1x4x256xf32>
    tpu.vector_store %arg3[%c0_15, %c0_16, %c0_17], %26 {strides = array<i32>} : memref<1x4x256xf32, #tpu.memory_space<vmem>>, vector<1x4x256xf32>,
    return
  }
  func.func @transform_0(%arg0: i32, %arg1: i32) -> (i32, i32, i32) {
    %c0_i32 = arith.constant 0 : i32
    %c0_i32_0 = arith.constant 0 : i32
    return %arg0, %c0_i32, %arg1 : i32, i32, i32
  }
  func.func @transform_1(%arg0: i32, %arg1: i32) -> (i32, i32, i32) {
    %c0_i32 = arith.constant 0 : i32
    %c0_i32_0 = arith.constant 0 : i32
    return %arg0, %c0_i32, %arg1 : i32, i32, i32
  }
}

</mosaic_0001>

<llo_original>
// kernel: tpu_custom_call.1
$region0: #{tpu_custom_call.1}
  #allocation0 [shape = 'u32[]', space=smem, size = 0x4, offset = 0x4, fixed_abs, tag = 'smem constant byte address 0x4 - core index']
  #allocation1 [shape = 'u32[144,128]{1,0:T(1,128)}', space=vmem, size = 0x12000, scoped, tag = 'internal scratch']
  #allocation2 [shape = 'f32[8,256]{1,0:T(8,128)}', space=vmem, size = 0x2000, scoped, tag = 'scratch operand']
  %s0 = inlined_call_operand.hbm [shape: f32[2,4,256], index: 0, kind: input, shape index: {}]
  %s1 = inlined_call_operand.hbm [shape: f32[2,4,256], index: 1, kind: output, shape index: {}]
  %s2 = sld [smem:[#allocation0]]
  $region41: #{tpu_custom_call.1} parent=0
    _
  %s4 = ssub.s32 1, %s2
  %s5 = scalar_select 0, %s4, %s2
  $region1: #{tpu_custom_call.1} parent=0
    #allocation3 [shape = 'u8[8192]{0}', space=vmem, size = 0x2000, scoped, tag = 'input window, operand 0']
    #allocation4 [shape = 's32[2]{0}', space=sflag, size = 0x8, scoped, tag = 'scoped memory for tpu_custom_call.1']
    #allocation5 [shape = 's32[2]{0}', space=sflag, size = 0x8, scoped, tag = 'scoped memory for tpu_custom_call.1']
    #allocation6 [shape = 'u8[8192]{0}', space=vmem, size = 0x2000, scoped, tag = 'output window, operand 0']
    %6 = vsyncpa [#allocation4], 0
    %s7 = scalar_lea.sflag [#allocation4], 1
    %8 = vsyncpa %s7, 0
    %9 = vsyncpa [#allocation5], 0
    %s10 = scalar_lea.sflag [#allocation5], 1
    %11 = vsyncpa %s10, 0
    loop: start=0, step=1, limit=4
    $region2: #{tpu_custom_call.1} parent=1 // loop_pre_header
      _
    $region3: #{tpu_custom_call.1} parent=1 // loop_header
      %s13 = sphi 0, %s17
      %p14 = scmp.ge.s32.totalorder %s13, 4
      %s20 = sphi 0, %s32
      %s21 = sphi 0, %s28
      %s22 = sphi 0, %s20
      %s23 = sphi 0, %s21
      %s24 = sphi 0, %s22
      %s25 = sphi 0, %s23
      %s37 = sphi 0, %s39
      %s40 = sphi 0, %s37
      %s41 = sphi 0, %s40
      %s57 = sphi 0, %s41
      %s65 = sphi 0, %s67
      %s68 = sphi 0, %s65
      %s69 = sphi 0, %s68
      %s85 = sphi 0, %s69
    $region4: #{tpu_custom_call.1} parent=1 // loop_header_branch
      %16 = sbr.rel (%p14) target = $region8
    $region5: #{tpu_custom_call.1} parent=1 // loop_body
      %s18 = ssub.s32 %s13, 1
      %s19 = ssub.s32 %s13, 2
      %s26 = sadd.s32 1, %s21
      %p27 = scmp.ge.s32.totalorder %s26, 1
      %s28 = scalar_select %p27, 0, %s26
      %s29 = sadd.s32 1, %s20
      %s30 = scalar_select %p27, %s29, %s20
      %p31 = scmp.ge.s32.totalorder %s30, 2
      %s32 = scalar_select %p31, 0, %s30
      %s33 = ssub.s32 %s20, %s32
      %s34 = ssub.s32 %s21, %s28
      %s35 = sor.u32 %s33, %s34
      %p36 = scmp.eq.s32.totalorder %s35, 0
      %s38 = sadd.s32 %s37, 1
      %s39 = scalar_select %p36, %s37, %s38
      %p42 = pneg %p36
      %p43 = scmp.eq.s32.totalorder %s13, 1
      %p44 = por %p42, %p43
      %p45 = scmp.ne.s32.totalorder %s37, %s40
      %p46 = scmp.eq.s32.totalorder %s13, 0
      %p47 = por %p45, %p46
      %p48 = scmp.ne.s32.totalorder %s37, %s40
      %p49 = scmp.eq.s32.totalorder %s18, 1
      %p50 = por %p48, %p49
      %p51 = scmp.ne.s32.totalorder %s40, %s41
      %p52 = scmp.eq.s32.totalorder %s18, 0
      %p53 = por %p51, %p52
      %p54 = scmp.ne.s32.totalorder %s40, %s41
      %p55 = scmp.eq.s32.totalorder %s19, 1
      %p56 = por %p54, %p55
      %p58 = scmp.ne.s32.totalorder %s41, %s57
      %p59 = scmp.eq.s32.totalorder %s19, 0
      %p60 = por %p58, %p59
      %s61 = ssub.s32 %s20, %s32
      %s62 = ssub.s32 %s21, %s28
      %s63 = sor.u32 %s61, %s62
      %p64 = scmp.eq.s32.totalorder %s63, 0
      %s66 = sadd.s32 %s65, 1
      %s67 = scalar_select %p64, %s65, %s66
      %p70 = pneg %p64
      %p71 = scmp.eq.s32.totalorder %s13, 1
      %p72 = por %p70, %p71
      %p73 = scmp.ne.s32.totalorder %s65, %s68
      %p74 = scmp.eq.s32.totalorder %s13, 0
      %p75 = por %p73, %p74
      %p76 = scmp.ne.s32.totalorder %s65, %s68
      %p77 = scmp.eq.s32.totalorder %s18, 1
      %p78 = por %p76, %p77
      %p79 = scmp.ne.s32.totalorder %s68, %s69
      %p80 = scmp.eq.s32.totalorder %s18, 0
      %p81 = por %p79, %p80
      %p82 = scmp.ne.s32.totalorder %s68, %s69
      %p83 = scmp.eq.s32.totalorder %s19, 1
      %p84 = por %p82, %p83
      %p86 = scmp.ne.s32.totalorder %s69, %s85
      %p87 = scmp.eq.s32.totalorder %s19, 0
      %p88 = por %p86, %p87
      %p89 = scmp.le.s32.totalorder 1, %s13
      %p90 = scmp.lt.s32.totalorder %s13, 3
      %p91 = pnand %p89, %p90
      %p92 = pneg %p91
      // Predicated region
      $region9: #{tpu_custom_call.1} parent=5 // pred_check
        _
      $region10: #{tpu_custom_call.1} parent=5 // pred_check_branch
        %94 = sbr.rel (%p91) target = $region12
      $region11: #{tpu_custom_call.1} parent=5 // pred_region
        %s95 = ssub.s32 %s13, 1
      $region12: #{tpu_custom_call.1} parent=5 // pred_fallthru
        _
      %p96 = scmp.lt.s32.totalorder %s13, 2
      // Predicated region
      $region13: #{tpu_custom_call.1} parent=5 // pred_check
        %p97 = pneg %p96
      $region14: #{tpu_custom_call.1} parent=5 // pred_check_branch
        %99 = sbr.rel (%p97) target = $region16
      $region15: #{tpu_custom_call.1} parent=5 // pred_region
        // Predicated region
        $region17: #{tpu_custom_call.1} parent=15 // pred_check
          %p100 = pneg %p47
        $region18: #{tpu_custom_call.1} parent=15 // pred_check_branch
          %102 = sbr.rel (%p100) target = $region20
        $region19: #{tpu_custom_call.1} parent=15 // pred_region
          %s103 = sand.u32 %s37, 1
          %s104 = scalar_lea.sflag [#allocation4], %s103
          %s105 = sand.u32 %s37, 1
          %s106 = smul.addr %s105, 8
          %s107 = scalar_lea.vmem [#allocation3], %s106
          %s108 = smul.u32 2, %s21
          %s110 = ssub.s32 128, 128
          %111 = vsyncadd %s104, %s110
          %s112 = smul.addr %s20, 2
          %s113 = sadd.s32 %s108, %s112
          %s114 = smul.addr %s113, 64
          %s115 = scalar_lea.hbm %s0, %s114
          %s117 = sshll.u32 %s107, 4
          %s118 = int_to_ptr.vmem [resolvable:$true] %s117
          %120 = dma.hbm_to_vmem [thread:$0]  %s115, 128, %s118, %s104
        $region20: #{tpu_custom_call.1} parent=15 // pred_fallthru
          _
      $region16: #{tpu_custom_call.1} parent=5 // pred_fallthru
        _
      %p121 = scmp.le.s32.totalorder 1, %s13
      %p122 = scmp.lt.s32.totalorder %s13, 3
      %p123 = pnand %p121, %p122
      %p124 = pneg %p123
      // Predicated region
      $region21: #{tpu_custom_call.1} parent=5 // pred_check
        _
      $region22: #{tpu_custom_call.1} parent=5 // pred_check_branch
        %126 = sbr.rel (%p123) target = $region24
      $region23: #{tpu_custom_call.1} parent=5 // pred_region
        %s127 = ssub.s32 %s13, 1
        %s128 = sand.u32 %s40, 1
        %s129 = scalar_lea.sflag [#allocation4], %s128
        %s130 = sand.u32 %s40, 1
        %s131 = smul.addr %s130, 8
        %s132 = scalar_lea.vmem [#allocation3], %s131
        // Predicated region
        $region25: #{tpu_custom_call.1} parent=23 // pred_check
          %p133 = pneg %p53
        $region26: #{tpu_custom_call.1} parent=23 // pred_check_branch
          %135 = sbr.rel (%p133) target = $region28
        $region27: #{tpu_custom_call.1} parent=23 // pred_region
          %136 = dma.done %s129, 128
        $region28: #{tpu_custom_call.1} parent=23 // pred_fallthru
          _
        %s137 = sand.u32 %s40, 1
        %s138 = scalar_lea.sflag [#allocation4], %s137
        %s139 = sand.u32 %s40, 1
        %s140 = smul.addr %s139, 8
        %s141 = scalar_lea.vmem [#allocation3], %s140
        %p142 = pneg %p53
        %p143 = pneg %p50
        %p144 = pneg %p81
        %p145 = pneg %p78
        %s146 = sand.u32 %s68, 1
        %s147 = scalar_lea.sflag [#allocation5], %s146
        %s148 = sand.u32 %s68, 1
        %s149 = smul.addr %s148, 8
        %s150 = scalar_lea.vmem [#allocation6], %s149
        %s151 = smul.u32 2, %s23
        %s152 = smul.u32 2, %s23
        %v153 = vld [vmem:[%s132] sm:$0xff]
        %154 = vst [vmem:[#allocation2] sm:$0x3] 0.0
        %155 = vst [vmem:[#allocation2 + $0x8] sm:$0x3] 0.0
        %156 = vst [vmem:[#allocation2] sm:$0xc0] 0.0
        %157 = vst [vmem:[#allocation2 + $0x8] sm:$0xc0] 0.0
        %v158 = vmul.f32 %v153, %v153
        %v160 = vcombine.high %v158, %v158
        %v161 = vrot.slane %v158, 6
        %v162 = vrot.slane %v160, 6
        %165 = vst [vmem:[#allocation2] sm:$0x3c] %v161
        %166 = vst [vmem:[#allocation2 + $0x8] sm:$0x3c] %v162
        %v167 = vld [vmem:[#allocation2] sm:$0xf]
        %v168 = vld [vmem:[#allocation2 + $0x8] sm:$0xf]
        %v169 = vld [vmem:[#allocation2] sm:$0x1e]
        %v170 = vld [vmem:[#allocation2 + $0x8] sm:$0x1e]
        %v173 = vrot.slane %v169, 1
        %v174 = vrot.slane %v170, 1
        %v177 = vadd.f32 %v167, %v173
        %v178 = vadd.f32 %v168, %v174
        %v179 = vld [vmem:[#allocation2] sm:$0x3c]
        %v180 = vld [vmem:[#allocation2 + $0x8] sm:$0x3c]
        %v183 = vrot.slane %v179, 2
        %v184 = vrot.slane %v180, 2
        %v187 = vadd.f32 %v177, %v183
        %v188 = vadd.f32 %v178, %v184
        %v189 = vld [vmem:[#allocation2] sm:$0x78]
        %v190 = vld [vmem:[#allocation2 + $0x8] sm:$0x78]
        %v193 = vrot.slane %v189, 3
        %v194 = vrot.slane %v190, 3
        %v197 = vadd.f32 %v187, %v193
        %v198 = vadd.f32 %v188, %v194
        %v199 = vld [vmem:[#allocation2] sm:$0xf0]
        %v200 = vld [vmem:[#allocation2 + $0x8] sm:$0xf0]
        %v203 = vrot.slane %v199, 4
        %v204 = vrot.slane %v200, 4
        %v207 = vadd.f32 %v197, %v203
        %v208 = vadd.f32 %v198, %v204
        %v209 = vmul.f32 %v207, 0.0001
        %v210 = vmul.f32 %v208, 0.0001
        %v211 = vadd.f32 %v209, 2.0
        %v212 = vadd.f32 %v210, 2.0
        %v213 = vrsqrt.pop %v211
        %v214 = vrsqrt.pop %v212
        %v215 = vrsqrt.pop %v213
        %v216 = vmul.f32 %v213, %v215
        %vm217 = vcmp.eq.f32.partialorder %v213, inf
        %v218 = vsel %vm217, %v213, %v216
        %vm219 = vcmp.eq.f32.partialorder %v213, 0.0
        %v220 = vand.u32 %v213, 2147483648
        %v221 = vsel %vm219, %v220, %v218
        %v222 = vrsqrt.pop %v214
        %v223 = vmul.f32 %v214, %v222
        %vm224 = vcmp.eq.f32.partialorder %v214, inf
        %v225 = vsel %vm224, %v214, %v223
        %vm226 = vcmp.eq.f32.partialorder %v214, 0.0
        %v227 = vand.u32 %v214, 2147483648
        %v228 = vsel %vm226, %v227, %v225
        %v229 = vmul.f32 %v213, %v221
        %v230 = vmul.f32 %v214, %v228
        %v233 = vcombine.low %v229, %v230
        %v235 = vmul.f32 %v153, %v233
        %236 = vst [vmem:[%s150] sm:$0xff] %v235
        %s237 = sand.u32 %s68, 1
        %s238 = scalar_lea.sflag [#allocation5], %s237
        %s239 = sand.u32 %s68, 1
        %s240 = smul.addr %s239, 8
        %s241 = scalar_lea.vmem [#allocation6], %s240
        // Predicated region
        $region29: #{tpu_custom_call.1} parent=23 // pred_check
          %p242 = pneg %p78
        $region30: #{tpu_custom_call.1} parent=23 // pred_check_branch
          %244 = sbr.rel (%p242) target = $region32
        $region31: #{tpu_custom_call.1} parent=23 // pred_region
          %s245 = smul.u32 2, %s23
          %s247 = ssub.s32 128, 128
          %248 = vsyncadd %s238, %s247
          %s249 = smul.addr %s22, 2
          %s250 = sadd.s32 %s245, %s249
          %s251 = smul.addr %s250, 64
          %s252 = scalar_lea.hbm %s1, %s251
          %s254 = sshll.u32 %s241, 4
          %s255 = int_to_ptr.vmem [resolvable:$true] %s254
          %257 = dma.vmem_to_hbm [thread:$0]  %s255, 128, %s252, %s238
        $region32: #{tpu_custom_call.1} parent=23 // pred_fallthru
          _
      $region24: #{tpu_custom_call.1} parent=5 // pred_fallthru
        _
      %p258 = scmp.le.s32.totalorder 2, %s13
      // Predicated region
      $region33: #{tpu_custom_call.1} parent=5 // pred_check
        %p259 = pneg %p258
      $region34: #{tpu_custom_call.1} parent=5 // pred_check_branch
        %261 = sbr.rel (%p259) target = $region36
      $region35: #{tpu_custom_call.1} parent=5 // pred_region
        %s262 = ssub.s32 %s13, 2
        // Predicated region
        $region37: #{tpu_custom_call.1} parent=35 // pred_check
          %p263 = pneg %p84
        $region38: #{tpu_custom_call.1} parent=35 // pred_check_branch
          %265 = sbr.rel (%p263) target = $region40
        $region39: #{tpu_custom_call.1} parent=35 // pred_region
          %s266 = sand.u32 %s69, 1
          %s267 = scalar_lea.sflag [#allocation5], %s266
          %s268 = sand.u32 %s69, 1
          %s269 = smul.addr %s268, 8
          %s270 = scalar_lea.vmem [#allocation6], %s269
          %271 = dma.done %s267, 128
        $region40: #{tpu_custom_call.1} parent=35 // pred_fallthru
          _
      $region36: #{tpu_custom_call.1} parent=5 // pred_fallthru
        _
    $region6: #{tpu_custom_call.1} parent=1 // loop_footer
      %s17 = sadd.s32 1, %s13
    $region7: #{tpu_custom_call.1} parent=1 // loop_footer_branch
      %12 = sbr.rel target = $region3
    $region8: #{tpu_custom_call.1} parent=1 // loop_exit
      _
    %272 = vsyncpa [#allocation4], 1
    %s273 = scalar_lea.sflag [#allocation4], 1
    %274 = vsyncpa %s273, 1
    %275 = vsyncpa [#allocation5], 1
    %s276 = scalar_lea.sflag [#allocation5], 1
    %277 = vsyncpa %s276, 1

</llo_original>
